<compile_context>
chip_gen: v7x
topology: tpu7x:2x2x1
jax: 0.10.0
libtpu: 0.0.40
codegen_flags: <defaults>
</compile_context>

<pallas_src>
import jax
import jax.numpy as jnp
from jax.experimental import pallas as pl
from jax.experimental.pallas import tpu as pltpu


_NEG_BIG = jnp.float32(-1e30)   # finite "minus infinity" for padded class lanes


def parent_atten_kernel(x_ref, wg_ref, wv_ref, bv_ref, out_ref):
    # x_ref  : (bm, 3H) stacked [ht ct pt] rows (compute dtype)
    # wg_ref : (3H, H)  Wg_linear weight, pre-transposed (in, out), resident
    # wv_ref : (H, Cp)  Wv_linear weight, pre-transposed, lane-padded to 128
    # bv_ref : (1, Cp)  Wv_linear bias (f32); padded lanes hold -1e30
    # out_ref: (bm, Cp) lane-dense log_softmax output (f32)

    # Single K=3H MXU pass with f32 accumulation (K=96 fits one pass on all gens).
    pre = jnp.dot(x_ref[...], wg_ref[...], preferred_element_type=jnp.float32)
    gt = jnp.tanh(pre)                                           # (bm, H), f32

    logits = (
        jnp.dot(gt.astype(wv_ref.dtype), wv_ref[...],
                preferred_element_type=jnp.float32)
        + bv_ref[...]
    )                                                            # (bm, Cp), f32

    # log_softmax along the (lane-dense, padded) class dim, all in f32.
    # Padded lanes carry -1e30: they never win the max and exp() underflows
    # to 0, so the real-class results are exact.
    m = jnp.max(logits, axis=-1, keepdims=True)
    shifted = logits - m
    lse = jnp.log(jnp.sum(jnp.exp(shifted), axis=-1, keepdims=True))
    out_ref[...] = (shifted - lse).astype(out_ref.dtype)


def parent_atten_forward(ht, ct, pt, wg_t, wv_t, bv, *,
                         compute_dtype=jnp.float32, max_block_rows=512):
    """Batched Parent_atten forward.

    ht, ct, pt : (H,) or (B, H) activations (B decode steps / beam entries).
    wg_t       : (3H, H)  Wg_linear.weight transposed.
    wv_t       : (H, C)   Wv_linear.weight transposed.
    bv         : (C,)     Wv_linear.bias.
    Returns (B, C) float32 log-probabilities.
    """
    ht = jnp.atleast_2d(ht)
    ct = jnp.atleast_2d(ct)
    pt = jnp.atleast_2d(pt)
    B, H = ht.shape
    C = wv_t.shape[1]
    Cp = pl.cdiv(C, 128) * 128          # lane-dense class dim (multiple of 128)

    # One cheap XLA concat in the wrapper -> single K=3H MXU dot in the kernel.
    x = jnp.concatenate([ht, ct, pt], axis=1).astype(compute_dtype)   # (B, 3H)
    wg = wg_t.astype(compute_dtype)                                    # (3H, H)
    wv = jnp.pad(wv_t, ((0, 0), (0, Cp - C))).astype(compute_dtype)    # (H, Cp)
    bvp = jnp.full((1, Cp), _NEG_BIG, dtype=jnp.float32)
    bvp = bvp.at[0, :C].set(bv.astype(jnp.float32))

    itemsize = jnp.dtype(compute_dtype).itemsize
    cost = pl.CostEstimate(
        flops=2 * B * (3 * H * H + H * Cp),
        transcendentals=B * (H + Cp),                 # tanh + exp (+log)
        bytes_accessed=(x.size + wg.size + wv.size) * itemsize
                       + bvp.size * 4 + B * Cp * 4,
    )

    if B <= max_block_rows:
        # Single gridless block: no per-step pipeline overhead; activations,
        # weights and output (a few KiB) all sit in VMEM for the whole call.
        out = pl.pallas_call(
            parent_atten_kernel,
            out_shape=jax.ShapeDtypeStruct((B, Cp), jnp.float32),
            cost_estimate=cost,
        )(x, wg, wv, bvp)
        return out[:, :C]

    # Large-B path only: row-block the activations; weights/bias stay
    # VMEM-resident via constant index_map.  block_rows is a multiple of 16
    # so sublanes are fully packed for both f32 (8,128) and bf16 (16,128).
    block_rows = max(16, (max_block_rows // 16) * 16)
    padded = pl.cdiv(B, block_rows) * block_rows
    if padded != B:
        x = jnp.pad(x, ((0, padded - B), (0, 0)))
    grid = (padded // block_rows,)

    out = pl.pallas_call(
        parent_atten_kernel,
        out_shape=jax.ShapeDtypeStruct((padded, Cp), jnp.float32),
        grid=grid,
        in_specs=[pl.BlockSpec((block_rows, 3 * H), lambda i: (i, 0)),
                  pl.BlockSpec(wg.shape, lambda i: (0, 0)),
                  pl.BlockSpec(wv.shape, lambda i: (0, 0)),
                  pl.BlockSpec(bvp.shape, lambda i: (0, 0))],
        out_specs=pl.BlockSpec((block_rows, Cp), lambda i: (i, 0)),
        compiler_params=pltpu.CompilerParams(
            dimension_semantics=("parallel",)),   # v7x: split row blocks across TCs
        cost_estimate=cost,
    )(x, wg, wv, bvp)
    return out[:B, :C]


def _reference(ht, ct, pt, wg_t, wv_t, bv):
    x = jnp.concatenate([jnp.atleast_2d(ht), jnp.atleast_2d(ct),
                         jnp.atleast_2d(pt)], axis=1).astype(jnp.float32)
    gt = jnp.tanh(x @ wg_t.astype(jnp.float32))
    logits = gt @ wv_t.astype(jnp.float32) + bv.reshape(1, -1).astype(jnp.float32)
    return jax.nn.log_softmax(logits, axis=1)


if __name__ == "__main__":
    hidden_dim = 32
    vocab_value_size = 16   # Parent_atten output classes (main_model passes vocab_value_size)

    key = jax.random.PRNGKey(0)
    k_ht, k_ct, k_pt, k_wg, k_wv, k_bv, k_b = jax.random.split(key, 7)

    # PyTorch-Linear-like uniform init, stored transposed as (in, out).
    bound_g = 1.0 / jnp.sqrt(3.0 * hidden_dim)
    bound_v = 1.0 / jnp.sqrt(1.0 * hidden_dim)
    wg_t = jax.random.uniform(k_wg, (3 * hidden_dim, hidden_dim),
                              minval=-bound_g, maxval=bound_g, dtype=jnp.float32)
    wv_t = jax.random.uniform(k_wv, (hidden_dim, vocab_value_size),
                              minval=-bound_v, maxval=bound_v, dtype=jnp.float32)
    bv = jax.random.uniform(k_bv, (vocab_value_size,),
                            minval=-bound_v, maxval=bound_v, dtype=jnp.float32)

    # ---- single-timestep path (matches the original module call exactly) ----
    ht = jax.random.normal(k_ht, (hidden_dim,), dtype=jnp.float32)
    ct = jax.random.normal(k_ct, (hidden_dim,), dtype=jnp.float32)
    pt = jax.random.normal(k_pt, (hidden_dim,), dtype=jnp.float32)

    yt = parent_atten_forward(ht, ct, pt, wg_t, wv_t, bv)    # f32, gridless
    yt = jax.block_until_ready(yt)
    yt_ref = _reference(ht, ct, pt, wg_t, wv_t, bv)
    assert yt.shape == (1, vocab_value_size)
    assert jnp.allclose(yt, yt_ref, atol=1e-4, rtol=1e-4), (
        float(jnp.max(jnp.abs(yt - yt_ref))))

    # ---- batched path: 16 decode steps stacked, single gridless block -------
    B = 16
    kb1, kb2, kb3 = jax.random.split(k_b, 3)
    hts = jax.random.normal(kb1, (B, hidden_dim), dtype=jnp.float32)
    cts = jax.random.normal(kb2, (B, hidden_dim), dtype=jnp.float32)
    pts = jax.random.normal(kb3, (B, hidden_dim), dtype=jnp.float32)

    ytb = parent_atten_forward(hts, cts, pts, wg_t, wv_t, bv)   # f32, gridless
    ytb = jax.block_until_ready(ytb)
    ytb_ref = _reference(hts, cts, pts, wg_t, wv_t, bv)
    assert ytb.shape == (B, vocab_value_size)
    assert jnp.allclose(ytb, ytb_ref, atol=1e-4, rtol=1e-4), (
        float(jnp.max(jnp.abs(ytb - ytb_ref))))

    # ---- bf16-operand variant (for fusion into a bf16 pipeline) -------------
    ytb_bf16 = parent_atten_forward(hts, cts, pts, wg_t, wv_t, bv,
                                    compute_dtype=jnp.bfloat16)
    ytb_bf16 = jax.block_until_ready(ytb_bf16)
    assert jnp.allclose(ytb_bf16, ytb_ref, atol=1e-1, rtol=1e-1), (
        float(jnp.max(jnp.abs(ytb_bf16 - ytb_ref))))

    # ---- large-B gridded path (exercised with a small forced block size) ----
    Bg = 40
    kg1, kg2, kg3 = jax.random.split(jax.random.PRNGKey(1), 3)
    htg = jax.random.normal(kg1, (Bg, hidden_dim), dtype=jnp.float32)
    ctg = jax.random.normal(kg2, (Bg, hidden_dim), dtype=jnp.float32)
    ptg = jax.random.normal(kg3, (Bg, hidden_dim), dtype=jnp.float32)

    ytg = parent_atten_forward(htg, ctg, ptg, wg_t, wv_t, bv,
                               max_block_rows=16)    # grid=(3,), rows padded to 48
    ytg = jax.block_until_ready(ytg)
    ytg_ref = _reference(htg, ctg, ptg, wg_t, wv_t, bv)
    assert ytg.shape == (Bg, vocab_value_size)
    assert jnp.allclose(ytg, ytg_ref, atol=1e-4, rtol=1e-4), (
        float(jnp.max(jnp.abs(ytg - ytg_ref))))

    print("KERNEL_OK")
</pallas_src>

<mosaic_0001>
module attributes {stable_mosaic.version = 11 : i64} {
  func.func @parent_atten_kernel(%arg0: memref<1x96xf32, #tpu.memory_space<vmem>>, %arg1: memref<96x32xf32, #tpu.memory_space<vmem>>, %arg2: memref<32x128xf32, #tpu.memory_space<vmem>>, %arg3: memref<1x128xf32, #tpu.memory_space<vmem>>, %arg4: memref<1x128xf32, #tpu.memory_space<vmem>>) attributes {dimension_semantics = [], scalar_prefetch = 0 : i64, scratch_operands = 0 : i64, tpu.core_type = #tpu.core_type<tc>} {
    %c0 = arith.constant 0 : index
    %c0_0 = arith.constant 0 : index
    %0 = vector.load %arg0[%c0, %c0_0] : memref<1x96xf32, #tpu.memory_space<vmem>>, vector<1x96xf32>
    %c0_1 = arith.constant 0 : index
    %c0_2 = arith.constant 0 : index
    %1 = vector.load %arg1[%c0_1, %c0_2] : memref<96x32xf32, #tpu.memory_space<vmem>>, vector<96x32xf32>
    %cst = arith.constant dense<0.000000e+00> : vector<1x32xf32>
    %2 = tpu.matmul %0, %1, %cst {dimension_numbers = #tpu.dot_dimension_numbers<[1], [0], [0], [1], [0, 0, 1, 1], [], []>} : vector<1x96xf32>, vector<96x32xf32>, vector<1x32xf32> -> vector<1x32xf32>
    %3 = math.tanh %2 : vector<1x32xf32>
    %c0_3 = arith.constant 0 : index
    %c0_4 = arith.constant 0 : index
    %4 = vector.load %arg2[%c0_3, %c0_4] : memref<32x128xf32, #tpu.memory_space<vmem>>, vector<32x128xf32>
    %cst_5 = arith.constant dense<0.000000e+00> : vector<1x128xf32>
    %5 = tpu.matmul %3, %4, %cst_5 {dimension_numbers = #tpu.dot_dimension_numbers<[1], [0], [0], [1], [0, 0, 1, 1], [], []>} : vector<1x32xf32>, vector<32x128xf32>, vector<1x128xf32> -> vector<1x128xf32>
    %c0_6 = arith.constant 0 : index
    %c0_7 = arith.constant 0 : index
    %6 = vector.load %arg3[%c0_6, %c0_7] : memref<1x128xf32, #tpu.memory_space<vmem>>, vector<1x128xf32>
    %7 = arith.addf %5, %6 : vector<1x128xf32>
    %cst_8 = arith.constant dense<0xFF800000> : vector<1xf32>
    %8 = vector.multi_reduction <maximumf>, %7, %cst_8 [1] : vector<1x128xf32> to vector<1xf32>
    %9 = vector.shape_cast %8 : vector<1xf32> to vector<1x1xf32>
    %10 = vector.broadcast %9 : vector<1x1xf32> to vector<1x128xf32>
    %11 = arith.subf %7, %10 : vector<1x128xf32>
    %12 = math.exp %11 : vector<1x128xf32>
    %cst_9 = arith.constant dense<0.000000e+00> : vector<1xf32>
    %13 = vector.multi_reduction <add>, %12, %cst_9 [1] : vector<1x128xf32> to vector<1xf32>
    %14 = vector.shape_cast %13 : vector<1xf32> to vector<1x1xf32>
    %15 = math.log %14 : vector<1x1xf32>
    %16 = vector.broadcast %15 : vector<1x1xf32> to vector<1x128xf32>
    %17 = arith.subf %11, %16 : vector<1x128xf32>
    %c0_10 = arith.constant 0 : index
    %c0_11 = arith.constant 0 : index
    %18 = vector.load %arg4[%c0_10, %c0_11] : memref<1x128xf32, #tpu.memory_space<vmem>>, vector<1x128xf32>
    tpu.vector_store %arg4[%c0_10, %c0_11], %17 {strides = array<i32>} : memref<1x128xf32, #tpu.memory_space<vmem>>, vector<1x128xf32>,
    return
  }
}

</mosaic_0001>

<llo_original>
// kernel: tpu_custom_call.1
$region0: #{tpu_custom_call.1}
  #allocation0 [shape = 'u32[]', space=smem, size = 0x4, offset = 0x4, fixed_abs, tag = 'smem constant byte address 0x4 - core index']
  #allocation1 [shape = 'u32[144,128]{1,0:T(1,128)}', space=vmem, size = 0x12000, scoped, tag = 'internal scratch']
  %s0 = inlined_call_operand.vmem [shape: f32[1,96], index: 0, kind: input, shape index: {}]
  %s1 = inlined_call_operand.vmem [shape: f32[96,32], index: 1, kind: input, shape index: {}]
  %s2 = inlined_call_operand.vmem [shape: f32[32,128], index: 2, kind: input, shape index: {}]
  %s3 = inlined_call_operand.vmem [shape: f32[1,128], index: 3, kind: input, shape index: {}]
  %s4 = inlined_call_operand.hbm [shape: f32[1,128], index: 4, kind: output, shape index: {}]
  %s5 = sld [smem:[#allocation0]]
  $region26: #{tpu_custom_call.1} parent=0
    _
  %s7 = ssub.s32 1, %s5
  %s8 = scalar_select 0, %s7, %s5
  $region1: #{tpu_custom_call.1} parent=0
    #allocation2 [shape = 'u8[512]{0}', space=vmem, size = 0x400, scoped, tag = 'output window, operand 0, single buffered']
    #allocation3 [shape = 's32[1]{0}', space=sflag, size = 0x4, scoped, tag = 'scoped memory for tpu_custom_call.1']
    %9 = vsyncpa [#allocation3], 0
    // Predicated region
    $region2: #{tpu_custom_call.1} parent=1 // pred_check
      _
    $region3: #{tpu_custom_call.1} parent=1 // pred_check_branch
      %11 = sbr.rel (0) target = $region5
    $region4: #{tpu_custom_call.1} parent=1 // pred_region
      _
    $region5: #{tpu_custom_call.1} parent=1 // pred_fallthru
      _
    // Predicated region
    $region6: #{tpu_custom_call.1} parent=1 // pred_check
      _
    $region7: #{tpu_custom_call.1} parent=1 // pred_check_branch
      %13 = sbr.rel (0) target = $region9
    $region8: #{tpu_custom_call.1} parent=1 // pred_region
      _
    $region9: #{tpu_custom_call.1} parent=1 // pred_fallthru
      _
    // Predicated region
    $region10: #{tpu_custom_call.1} parent=1 // pred_check
      _
    $region11: #{tpu_custom_call.1} parent=1 // pred_check_branch
      %15 = sbr.rel (0) target = $region13
    $region12: #{tpu_custom_call.1} parent=1 // pred_region
      _
    $region13: #{tpu_custom_call.1} parent=1 // pred_fallthru
      _
    // Predicated region
    $region14: #{tpu_custom_call.1} parent=1 // pred_check
      _
    $region15: #{tpu_custom_call.1} parent=1 // pred_check_branch
      %17 = sbr.rel (0) target = $region17
    $region16: #{tpu_custom_call.1} parent=1 // pred_region
      _
    $region17: #{tpu_custom_call.1} parent=1 // pred_fallthru
      _
    %v18 = vld [vmem:[%s0] sm:$0x1]
    %v19 = vld [vmem:[%s1] sm:$0xff]
    %v20 = vld [vmem:[%s1 + $0x8] sm:$0xff]
    %v21 = vld [vmem:[%s1 + $0x10] sm:$0xff]
    %v22 = vld [vmem:[%s1 + $0x18] sm:$0xff]
    %v23 = vld [vmem:[%s1 + $0x20] sm:$0xff]
    %v24 = vld [vmem:[%s1 + $0x28] sm:$0xff]
    %v25 = vld [vmem:[%s1 + $0x30] sm:$0xff]
    %v26 = vld [vmem:[%s1 + $0x38] sm:$0xff]
    %v27 = vld [vmem:[%s1 + $0x40] sm:$0xff]
    %v28 = vld [vmem:[%s1 + $0x48] sm:$0xff]
    %v29 = vld [vmem:[%s1 + $0x50] sm:$0xff]
    %v30 = vld [vmem:[%s1 + $0x58] sm:$0xff]
    %vm31 = vcmask 785408
    %v33 = vsel %vm31, %v18, 0
    %35 = vmatprep.subr.mxu0 0.0
    %36 = vmatpush1.msra.mxu0 %v19
    %37 = vmatprep.subr.mxu0 0.0
    %38 = vmatpush1.msra.mxu0 %v20
    %39 = vmatprep.subr.mxu0 0.0
    %40 = vmatpush1.msra.mxu0 %v21
    %41 = vmatprep.subr.mxu0 0.0
    %42 = vmatpush1.msra.mxu0 %v22
    %43 = vmatprep.subr.mxu0 0.0
    %44 = vmatpush1.msra.mxu0 %v23
    %45 = vmatprep.subr.mxu0 0.0
    %46 = vmatpush1.msra.mxu0 %v24
    %47 = vmatprep.subr.mxu0 0.0
    %48 = vmatpush1.msra.mxu0 %v25
    %49 = vmatprep.subr.mxu0 0.0
    %50 = vmatpush1.msra.mxu0 %v26
    %51 = vmatprep.subr.mxu0 0.0
    %52 = vmatpush1.msra.mxu0 %v27
    %53 = vmatprep.subr.mxu0 0.0
    %54 = vmatpush1.msra.mxu0 %v28
    %55 = vmatprep.subr.mxu0 0.0
    %56 = vmatpush1.msra.mxu0 %v29
    %57 = vmatprep.subr.mxu0 0.0
    %58 = vmatpush1.msra.mxu0 %v30
    %59 = vmatprep.subr.mxu0 0.0
    %60 = vmatpush1.msra.mxu0 0.0
    %61 = vmatprep.subr.mxu0 0.0
    %62 = vmatpush1.msra.mxu0 0.0
    %63 = vmatprep.subr.mxu0 0.0
    %64 = vmatpush1.msra.mxu0 0.0
    %65 = vmatprep.subr.mxu0 0.0
    %66 = vmatpush1.msra.mxu0 0.0
    %67 = vmatprep.subr.mxu0 0.0
    %68 = vmatpush1.msra.mxu0 0.0
    %69 = vmatprep.subr.mxu0 0.0
    %70 = vmatpush1.msra.mxu0 0.0
    %71 = vmatprep.subr.mxu0 0.0
    %72 = vmatpush1.msra.mxu0 0.0
    %73 = vmatprep.subr.mxu0 0.0
    %74 = vmatpush1.msra.mxu0 0.0
    %75 = vmatprep.subr.mxu0 0.0
    %76 = vmatpush1.msra.mxu0 0.0
    %77 = vmatprep.subr.mxu0 0.0
    %78 = vmatpush1.msra.mxu0 0.0
    %79 = vmatprep.subr.mxu0 0.0
    %80 = vmatpush1.msra.mxu0 0.0
    %81 = vmatprep.subr.mxu0 0.0
    %82 = vmatpush1.msra.mxu0 0.0
    %83 = vmatprep.subr.mxu0 0.0
    %84 = vmatpush1.msra.mxu0 0.0
    %85 = vmatprep.subr.mxu0 0.0
    %86 = vmatpush1.msra.mxu0 0.0
    %87 = vmatprep.subr.mxu0 0.0
    %88 = vmatpush1.msra.mxu0 0.0
    %89 = vmatprep.subr.mxu0 0.0
    %90 = vmatpush1.msra.mxu0 0.0
    %91 = vmatprep.subr.mxu0 0.0
    %92 = vmatpush1.msra.mxu0 0.0
    %93 = vmatprep.subr.mxu0 0.0
    %94 = vmatpush1.msra.mxu0 0.0
    %95 = vmatprep.subr.mxu0 0.0
    %96 = vmatpush1.msra.mxu0 0.0
    %97 = vmatprep.subr.mxu0 0.0
    %98 = vmatpush1.msra.mxu0 0.0
    %99 = vmatprep.mubr.f32.mxu0 0.0
    %100 = vmatmul.mubr.f32.gmra.mrb[0].mxu0 %v33
    %v101 = vpop.f32.mrb[0].mxu0
    %v102 = vadd.f32 0.0, %v101
    %v103 = vpop.f32.mrb[0].mxu0
    %104 = vdwg.mxu0
    %v105 = vtanh.pop %v102
    %v106 = vld [vmem:[%s2] sm:$0xff]
    %v107 = vld [vmem:[%s2 + $0x8] sm:$0xff]
    %v108 = vld [vmem:[%s2 + $0x10] sm:$0xff]
    %v109 = vld [vmem:[%s2 + $0x18] sm:$0xff]
    %v110 = vld [vmem:[%s3] sm:$0x1]
    %vm111 = vcmask 261120
    %v113 = vsel %vm111, %v105, 0
    %115 = vmatprep.subr.mxu0 0.0
    %116 = vmatpush1.msra.mxu0 %v106
    %117 = vmatprep.subr.mxu0 0.0
    %118 = vmatpush1.msra.mxu0 %v107
    %119 = vmatprep.subr.mxu0 0.0
    %120 = vmatpush1.msra.mxu0 %v108
    %121 = vmatprep.subr.mxu0 0.0
    %122 = vmatpush1.msra.mxu0 %v109
    %123 = vmatprep.subr.mxu0 0.0
    %124 = vmatpush1.msra.mxu0 0.0
    %125 = vmatprep.subr.mxu0 0.0
    %126 = vmatpush1.msra.mxu0 0.0
    %127 = vmatprep.subr.mxu0 0.0
    %128 = vmatpush1.msra.mxu0 0.0
    %129 = vmatprep.subr.mxu0 0.0
    %130 = vmatpush1.msra.mxu0 0.0
    %131 = vmatprep.subr.mxu0 0.0
    %132 = vmatpush1.msra.mxu0 0.0
    %133 = vmatprep.subr.mxu0 0.0
    %134 = vmatpush1.msra.mxu0 0.0
    %135 = vmatprep.subr.mxu0 0.0
    %136 = vmatpush1.msra.mxu0 0.0
    %137 = vmatprep.subr.mxu0 0.0
    %138 = vmatpush1.msra.mxu0 0.0
    %139 = vmatprep.subr.mxu0 0.0
    %140 = vmatpush1.msra.mxu0 0.0
    %141 = vmatprep.subr.mxu0 0.0
    %142 = vmatpush1.msra.mxu0 0.0
    %143 = vmatprep.subr.mxu0 0.0
    %144 = vmatpush1.msra.mxu0 0.0
    %145 = vmatprep.subr.mxu0 0.0
    %146 = vmatpush1.msra.mxu0 0.0
    %147 = vmatprep.subr.mxu0 0.0
    %148 = vmatpush1.msra.mxu0 0.0
    %149 = vmatprep.subr.mxu0 0.0
    %150 = vmatpush1.msra.mxu0 0.0
    %151 = vmatprep.subr.mxu0 0.0
    %152 = vmatpush1.msra.mxu0 0.0
    %153 = vmatprep.subr.mxu0 0.0
    %154 = vmatpush1.msra.mxu0 0.0
    %155 = vmatprep.subr.mxu0 0.0
    %156 = vmatpush1.msra.mxu0 0.0
    %157 = vmatprep.subr.mxu0 0.0
    %158 = vmatpush1.msra.mxu0 0.0
    %159 = vmatprep.subr.mxu0 0.0
    %160 = vmatpush1.msra.mxu0 0.0
    %161 = vmatprep.subr.mxu0 0.0
    %162 = vmatpush1.msra.mxu0 0.0
    %163 = vmatprep.subr.mxu0 0.0
    %164 = vmatpush1.msra.mxu0 0.0
    %165 = vmatprep.subr.mxu0 0.0
    %166 = vmatpush1.msra.mxu0 0.0
    %167 = vmatprep.subr.mxu0 0.0
    %168 = vmatpush1.msra.mxu0 0.0
    %169 = vmatprep.subr.mxu0 0.0
    %170 = vmatpush1.msra.mxu0 0.0
    %171 = vmatprep.subr.mxu0 0.0
    %172 = vmatpush1.msra.mxu0 0.0
    %173 = vmatprep.subr.mxu0 0.0
    %174 = vmatpush1.msra.mxu0 0.0
    %175 = vmatprep.subr.mxu0 0.0
    %176 = vmatpush1.msra.mxu0 0.0
    %177 = vmatprep.subr.mxu0 0.0
    %178 = vmatpush1.msra.mxu0 0.0
    %179 = vmatprep.mubr.f32.mxu0 0.0
    %180 = vmatmul.mubr.f32.gmra.mrb[0].mxu0 %v113
    %v181 = vpop.f32.mrb[0].mxu0
    %v182 = vadd.f32 %v110, %v181
    %v183 = vpop.f32.mrb[0].mxu0
    %184 = vdwg.mxu0
    %vm185 = vcmask 1040384
    %v186 = vsel %vm185, %v182, -inf
    %187 = vmax.xlane.f32.xlu0 %v186
    %v188 = vpop.xlane.xlu0 %187
    %v189 = vsub.f32 %v182, %v188
    %v190 = vmul.f32 %v189, 1.442695
    %v191 = vpow.pop %v190
    %v192 = vsel %vm185, %v191, 0.0
    %193 = vadd.xlane.f32.xlu0 %v192
    %v194 = vpop.xlane.xlu0 %193
    %v195 = vlog2.pop %v194
    %v196 = vmul.f32 %v195, 0.6931472
    %v197 = vsub.f32 %v189, %v196
    %198 = vst [vmem:[#allocation2] sm:$0x1] %v197
    // Predicated region
    $region18: #{tpu_custom_call.1} parent=1 // pred_check
      _
    $region19: #{tpu_custom_call.1} parent=1 // pred_check_branch
      %200 = sbr.rel (0) target = $region21
    $region20: #{tpu_custom_call.1} parent=1 // pred_region
      %s202 = ssub.s32 16, 16
      %203 = vsyncadd [#allocation3], %s202
      %s205 = sshll.u32 [#allocation2], 4
      %s206 = int_to_ptr.vmem [resolvable:$true] %s205
      %208 = dma.vmem_to_hbm [thread:$0]  %s206, 16, %s4, [#allocation3]
    $region21: #{tpu_custom_call.1} parent=1 // pred_fallthru
      _
    // Predicated region
    $region22: #{tpu_custom_call.1} parent=1 // pred_check
      _
    $region23: #{tpu_custom_call.1} parent=1 // pred_check_branch
      %210 = sbr.rel (0) target = $region25
    $region24: #{tpu_custom_call.1} parent=1 // pred_region
      %211 = dma.done [#allocation3], 16
    $region25: #{tpu_custom_call.1} parent=1 // pred_fallthru
      _
    %212 = vsyncpa [#allocation3], 1

</llo_original>
